<compile_context>
chip_gen: v7x
topology: tpu7x:2x2x1
jax: 0.10.0
libtpu: 0.0.40
codegen_flags: <defaults>
</compile_context>

<pallas_src>
import functools

import jax
import jax.numpy as jnp
from jax import lax
from jax.experimental import pallas as pl
from jax.experimental.pallas import tpu as pltpu

BN_EPS = 1e-4

_LANE = 128
_SUBLANE = 8
# Conservative per-kernel VMEM usage budget: fits v7x (64 MiB physical / 32 MiB default
# scoped), v6e and v5e.  The scoped limit itself is raised to 48 MiB (v5e default is only
# 16 MiB and would otherwise bind first).
_VMEM_BUDGET = 24 * 1024 * 1024
_VMEM_LIMIT = 48 * 1024 * 1024
_FUSED_MAX_B = 512     # whole-batch fused path threshold (latency-dominated regime)
_MAX_TILE_B = 1024     # diminishing returns past ~1K rows per tile


def _round_up(x, m):
    return -(-x // m) * m


# ----------------------------------------------------------------------------------------
# Fast path: whole batch in one tile -> fully fused Linear + BatchNorm.
# ----------------------------------------------------------------------------------------
def _fused_proj_bn_kernel(x_ref, w_ref, gamma_ref, beta_ref, out_ref):
    # x: (B, E) bf16; w: (E, Lp) bf16; gamma/beta: (1, Lp) f32; out: (B, Lp) f32
    mu = jnp.dot(x_ref[...], w_ref[...], preferred_element_type=jnp.float32)
    mean = jnp.mean(mu, axis=0, keepdims=True)
    centered = mu - mean                                   # centered -> stable variance
    var = jnp.mean(centered * centered, axis=0, keepdims=True)
    scale = gamma_ref[...] * lax.rsqrt(var + BN_EPS)
    out_ref[...] = (centered * scale + beta_ref[...]).astype(out_ref.dtype)


# ----------------------------------------------------------------------------------------
# Tiled path, pass 1: matmul tile + per-tile centered BN partial statistics.
# ----------------------------------------------------------------------------------------
def _matmul_stats_kernel(x_ref, w_ref, mu_ref, stats_ref, *, true_b, tile_b):
    i = pl.program_id(0)
    # Canonical (M,K)@(K,N) on the MXU; bf16 operands, f32 accumulation.
    mu = jnp.dot(x_ref[...], w_ref[...], preferred_element_type=jnp.float32)   # (tb, Lp)
    mu_ref[...] = mu.astype(mu_ref.dtype)                  # bf16 intermediate (halved traffic)

    # Padded batch rows are zero AND the Linear bias is elided, so their mu rows are exactly
    # zero: the plain column sum below already equals the sum over real rows only.
    # (Do NOT reintroduce the bias in-kernel -- it would silently corrupt these statistics.)
    n_i = jnp.minimum(true_b - i * tile_b, tile_b).astype(jnp.float32)   # real rows in tile
    col_sum = jnp.sum(mu, axis=0, keepdims=True)                         # (1, Lp)
    tile_mean = col_sum * (1.0 / n_i)
    row = lax.broadcasted_iota(jnp.int32, (tile_b, 1), 0) + i * tile_b
    centered = jnp.where(row < true_b, mu - tile_mean, 0.0)              # mask padded rows
    m2 = jnp.sum(centered * centered, axis=0, keepdims=True)             # centered SSQ (stable)

    stats_ref[0, 0:1, :] = col_sum
    stats_ref[0, 1:2, :] = m2


# ----------------------------------------------------------------------------------------
# Tiled path, pass 2: folded BN affine (one FMA per element).
# ----------------------------------------------------------------------------------------
def _normalize_kernel(mu_ref, scale_ref, shift_ref, out_ref):
    out_ref[...] = (mu_ref[...].astype(jnp.float32) * scale_ref[...]
                    + shift_ref[...]).astype(out_ref.dtype)


def projection_forward(data, weight, bias, gamma, beta, *, block_b=None):
    """Pallas forward of Projection.

    data: (B, E) f32; weight: (L, E); bias/gamma/beta: (L,).
    Returns (mu_bn (B, L) f32, kld (B,) f32).
    """
    del bias  # Cancels exactly under training-mode BatchNorm mean subtraction (constant
              # per-feature offset removed by centering; variance unaffected).

    B, E = data.shape
    L = weight.shape[0]
    Lp = _round_up(L, _LANE)          # lane-dense outputs

    # One-time wrapper-side prep (trivial HBM cost).
    w_t = jnp.pad(weight, ((0, Lp - L), (0, 0))).T.astype(jnp.bfloat16)       # (E, Lp) bf16
    x_bf = data.astype(jnp.bfloat16)                                          # (B, E) bf16
    gamma_p = jnp.pad(gamma.astype(jnp.float32), (0, Lp - L)).reshape(1, Lp)
    beta_p = jnp.pad(beta.astype(jnp.float32), (0, Lp - L)).reshape(1, Lp)

    kld = jnp.zeros((B,), jnp.float32)     # identically zero -> produced in the wrapper

    # ---- nb == 1 fast path: fully fused, no mu round-trip, no second launch. At these sizes
    # the kernel is latency-dominated, so splitting across v7x's two TensorCores would not
    # pay for the extra HBM pass that tiling requires.
    fused_bytes = B * E * 2 + E * Lp * 2 + 2 * B * Lp * 4
    if block_b is None and B <= _FUSED_MAX_B and fused_bytes <= _VMEM_BUDGET:
        out = pl.pallas_call(
            _fused_proj_bn_kernel,
            out_shape=jax.ShapeDtypeStruct((B, Lp), jnp.float32),
            compiler_params=pltpu.CompilerParams(vmem_limit_bytes=_VMEM_LIMIT),
            cost_estimate=pl.CostEstimate(
                flops=2 * B * E * Lp, transcendentals=0,
                bytes_accessed=B * E * 2 + E * Lp * 2 + B * Lp * 4),
        )(x_bf, w_t, gamma_p, beta_p)
        return out[:, :L], kld

    # ---- Tiled path ----------------------------------------------------------------------
    if block_b is None:
        # VMEM per step: 2*(tb*E*2) bf16 x + 2*(E*Lp*2) bf16 W (double-buffered; its block
        # index is constant so it is only DMA'd once) + 2*(tb*Lp*2) bf16 mu + tiny stats.
        # (pipeline_mode=pl.Buffered(1) on W would drop its second buffer; we instead account
        #  for 2*W in this budget to stay on the guaranteed-supported path.)
        tb = (_VMEM_BUDGET - 4 * E * Lp) // (4 * E + 4 * Lp)
        tb = max(_SUBLANE, (tb // _SUBLANE) * _SUBLANE)
        tb = min(tb, _MAX_TILE_B)
        # Megacore (v7x): keep nb >= 2 so the "parallel" B axis shards across both cores.
        tb = min(tb, _round_up(-(-B // 2), _SUBLANE))
        tb = max(tb, _SUBLANE)
    else:
        tb = max(1, min(block_b, B))
        if tb < B and tb % _SUBLANE != 0:
            tb = _round_up(tb, _SUBLANE)

    nb = -(-B // tb)
    b_pad = nb * tb
    if b_pad != B:
        # Zero rows give exactly-zero (bias-free) mu rows; the in-kernel mask keeps them out
        # of the centered statistics, so mean/var stay exact for any B.
        x_bf = jnp.pad(x_bf, ((0, b_pad - B), (0, 0)))

    parallel = pltpu.CompilerParams(dimension_semantics=("parallel",),
                                    vmem_limit_bytes=_VMEM_LIMIT)

    # ---- Pass 1: tiled matmul + per-tile centered statistics ------------------------------
    mu, stats = pl.pallas_call(
        functools.partial(_matmul_stats_kernel, true_b=B, tile_b=tb),
        grid=(nb,),
        in_specs=[
            pl.BlockSpec((tb, E), lambda i: (i, 0)),
            # Constant block index -> the pipeline only DMAs W once (block revisiting).
            pl.BlockSpec((E, Lp), lambda i: (0, 0)),
        ],
        out_specs=(
            pl.BlockSpec((tb, Lp), lambda i: (i, 0)),
            pl.BlockSpec((1, 2, Lp), lambda i: (i, 0, 0)),
        ),
        out_shape=(
            jax.ShapeDtypeStruct((b_pad, Lp), jnp.bfloat16),   # bf16 intermediate mu
            jax.ShapeDtypeStruct((nb, 2, Lp), jnp.float32),
        ),
        compiler_params=parallel,
        cost_estimate=pl.CostEstimate(
            flops=2 * b_pad * E * Lp, transcendentals=0,
            bytes_accessed=(b_pad * E * 2 + E * Lp * 2
                            + b_pad * Lp * 2 + nb * 2 * Lp * 4)),
    )(x_bf, w_t)

    # ---- Tiny (nb, Lp) stats combine (Chan's parallel algorithm) + gamma/beta folding -----
    counts = jnp.array([min(B - i * tb, tb) for i in range(nb)],
                       jnp.float32).reshape(nb, 1)
    col_sum = stats[:, 0, :]                                   # (nb, Lp)
    m2 = stats[:, 1, :]                                        # (nb, Lp)
    tile_mean = col_sum / counts
    mean = jnp.sum(col_sum, axis=0, keepdims=True) / B         # (1, Lp)
    delta = tile_mean - mean
    var = (jnp.sum(m2, axis=0, keepdims=True)
           + jnp.sum(counts * delta * delta, axis=0, keepdims=True)) / B   # biased, stable
    scale = gamma_p * lax.rsqrt(var + BN_EPS)                  # gamma / sqrt(var + eps)
    shift = beta_p - mean * scale                              # beta - mean * scale

    # ---- Pass 2: folded affine normalize (pure mem-bound FMA -> much larger row block) ----
    max_rows2 = max(tb, min(b_pad, _VMEM_BUDGET // (12 * Lp)))
    d_best = 1
    for d in range(1, nb + 1):
        if nb % d == 0 and tb * d <= max_rows2:
            d_best = d
    tb2 = tb * d_best
    nb2 = nb // d_best

    mu_bn = pl.pallas_call(
        _normalize_kernel,
        grid=(nb2,),
        in_specs=[
            pl.BlockSpec((tb2, Lp), lambda i: (i, 0)),
            pl.BlockSpec((1, Lp), lambda i: (0, 0)),
            pl.BlockSpec((1, Lp), lambda i: (0, 0)),
        ],
        out_specs=pl.BlockSpec((tb2, Lp), lambda i: (i, 0)),
        out_shape=jax.ShapeDtypeStruct((b_pad, Lp), jnp.float32),
        compiler_params=parallel,
    )(mu, scale, shift)

    return mu_bn[:B, :L], kld


def _reference(data, weight, bias, gamma, beta):
    mu = data @ weight.T + bias
    mean = jnp.mean(mu, axis=0, keepdims=True)
    var = jnp.mean((mu - mean) ** 2, axis=0, keepdims=True)
    mu_bn = (mu - mean) / jnp.sqrt(var + BN_EPS) * gamma + beta
    return mu_bn, jnp.zeros(data.shape[0], jnp.float32)


if __name__ == "__main__":
    # Small, module-consistent shapes.  The default call exercises the fused single-tile fast
    # path; the block_b=8 call exercises the tiled path (3 tiles, 4 zero-padded rows).
    batch_size = 20
    enc_size = 32
    n_latent = 16

    key = jax.random.PRNGKey(0)
    k_data, k_w, k_b = jax.random.split(key, 3)

    data = jax.random.normal(k_data, (batch_size, enc_size), dtype=jnp.float32)
    bound = 1.0 / (enc_size ** 0.5)
    weight = jax.random.uniform(k_w, (n_latent, enc_size), jnp.float32, -bound, bound)
    bias = jax.random.uniform(k_b, (n_latent,), jnp.float32, -bound, bound)
    gamma = jnp.full((n_latent,), 1.5, jnp.float32)
    beta = jnp.full((n_latent,), 0.25, jnp.float32)

    ref_mu, ref_kld = _reference(data, weight, bias, gamma, beta)

    mu_fast, kld_fast = projection_forward(data, weight, bias, gamma, beta)
    mu_fast = jax.block_until_ready(mu_fast)
    kld_fast = jax.block_until_ready(kld_fast)

    mu_tiled, kld_tiled = projection_forward(data, weight, bias, gamma, beta, block_b=8)
    mu_tiled = jax.block_until_ready(mu_tiled)

    assert mu_fast.shape == (batch_size, n_latent)
    assert kld_fast.shape == (batch_size,)
    # bf16 MXU operands (and bf16 mu intermediate on the tiled path) -> loosened tolerance.
    assert jnp.allclose(mu_fast, ref_mu, atol=5e-2, rtol=5e-2), \
        float(jnp.max(jnp.abs(mu_fast - ref_mu)))
    assert jnp.allclose(mu_tiled, ref_mu, atol=5e-2, rtol=5e-2), \
        float(jnp.max(jnp.abs(mu_tiled - ref_mu)))
    assert jnp.allclose(kld_fast, ref_kld) and jnp.allclose(kld_tiled, ref_kld)

    print("KERNEL_OK")
</pallas_src>

<mosaic_0001>
module attributes {stable_mosaic.version = 11 : i64} {
  func.func @_fused_proj_bn_kernel(%arg0: memref<20x32xbf16, #tpu.memory_space<vmem>>, %arg1: memref<32x128xbf16, #tpu.memory_space<vmem>>, %arg2: memref<1x128xf32, #tpu.memory_space<vmem>>, %arg3: memref<1x128xf32, #tpu.memory_space<vmem>>, %arg4: memref<20x128xf32, #tpu.memory_space<vmem>>) attributes {dimension_semantics = [], scalar_prefetch = 0 : i64, scratch_operands = 0 : i64, tpu.core_type = #tpu.core_type<tc>} {
    %c0 = arith.constant 0 : index
    %c0_0 = arith.constant 0 : index
    %0 = vector.load %arg0[%c0, %c0_0] : memref<20x32xbf16, #tpu.memory_space<vmem>>, vector<20x32xbf16>
    %c0_1 = arith.constant 0 : index
    %c0_2 = arith.constant 0 : index
    %1 = vector.load %arg1[%c0_1, %c0_2] : memref<32x128xbf16, #tpu.memory_space<vmem>>, vector<32x128xbf16>
    %cst = arith.constant dense<0.000000e+00> : vector<20x128xf32>
    %2 = tpu.matmul %0, %1, %cst {dimension_numbers = #tpu.dot_dimension_numbers<[1], [0], [0], [1], [0, 0, 1, 1], [], []>} : vector<20x32xbf16>, vector<32x128xbf16>, vector<20x128xf32> -> vector<20x128xf32>
    %cst_3 = arith.constant dense<0.000000e+00> : vector<128xf32>
    %3 = vector.multi_reduction <add>, %2, %cst_3 [0] : vector<20x128xf32> to vector<128xf32>
    %4 = vector.shape_cast %3 : vector<128xf32> to vector<1x128xf32>
    %cst_4 = arith.constant 2.000000e+01 : f32
    %5 = vector.broadcast %cst_4 : f32 to vector<1x128xf32>
    %6 = arith.divf %4, %5 : vector<1x128xf32>
    %7 = vector.broadcast %6 : vector<1x128xf32> to vector<20x128xf32>
    %8 = arith.subf %2, %7 : vector<20x128xf32>
    %9 = arith.mulf %8, %8 : vector<20x128xf32>
    %cst_5 = arith.constant dense<0.000000e+00> : vector<128xf32>
    %10 = vector.multi_reduction <add>, %9, %cst_5 [0] : vector<20x128xf32> to vector<128xf32>
    %11 = vector.shape_cast %10 : vector<128xf32> to vector<1x128xf32>
    %cst_6 = arith.constant 2.000000e+01 : f32
    %12 = vector.broadcast %cst_6 : f32 to vector<1x128xf32>
    %13 = arith.divf %11, %12 : vector<1x128xf32>
    %c0_7 = arith.constant 0 : index
    %c0_8 = arith.constant 0 : index
    %14 = vector.load %arg2[%c0_7, %c0_8] : memref<1x128xf32, #tpu.memory_space<vmem>>, vector<1x128xf32>
    %cst_9 = arith.constant 9.99999974E-5 : f32
    %15 = vector.broadcast %cst_9 : f32 to vector<1x128xf32>
    %16 = arith.addf %13, %15 : vector<1x128xf32>
    %17 = math.rsqrt %16 : vector<1x128xf32>
    %18 = arith.mulf %14, %17 : vector<1x128xf32>
    %19 = vector.broadcast %18 : vector<1x128xf32> to vector<20x128xf32>
    %20 = arith.mulf %8, %19 : vector<20x128xf32>
    %c0_10 = arith.constant 0 : index
    %c0_11 = arith.constant 0 : index
    %21 = vector.load %arg3[%c0_10, %c0_11] : memref<1x128xf32, #tpu.memory_space<vmem>>, vector<1x128xf32>
    %22 = vector.broadcast %21 : vector<1x128xf32> to vector<20x128xf32>
    %23 = arith.addf %20, %22 : vector<20x128xf32>
    %c0_12 = arith.constant 0 : index
    %c0_13 = arith.constant 0 : index
    %24 = vector.load %arg4[%c0_12, %c0_13] : memref<20x128xf32, #tpu.memory_space<vmem>>, vector<20x128xf32>
    tpu.vector_store %arg4[%c0_12, %c0_13], %23 {strides = array<i32>} : memref<20x128xf32, #tpu.memory_space<vmem>>, vector<20x128xf32>,
    return
  }
}

</mosaic_0001>

<llo_original>
// kernel: tpu_custom_call.1
$region0: #{tpu_custom_call.1}
  #allocation0 [shape = 'u32[]', space=smem, size = 0x4, offset = 0x4, fixed_abs, tag = 'smem constant byte address 0x4 - core index']
  #allocation1 [shape = 'u32[144,128]{1,0:T(1,128)}', space=vmem, size = 0x12000, scoped, tag = 'internal scratch']
  %s0 = inlined_call_operand.hbm [shape: bf16[20,32], index: 0, kind: input, shape index: {}]
  %s1 = inlined_call_operand.hbm [shape: bf16[32,128], index: 1, kind: input, shape index: {}]
  %s2 = inlined_call_operand.vmem [shape: f32[1,128], index: 2, kind: input, shape index: {}]
  %s3 = inlined_call_operand.vmem [shape: f32[1,128], index: 3, kind: input, shape index: {}]
  %s4 = inlined_call_operand.hbm [shape: f32[20,128], index: 4, kind: output, shape index: {}]
  %s5 = sld [smem:[#allocation0]]
  $region34: #{tpu_custom_call.1} parent=0
    _
  %s7 = ssub.s32 1, %s5
  %s8 = scalar_select 0, %s7, %s5
  $region1: #{tpu_custom_call.1} parent=0
    #allocation2 [shape = 'u8[6144]{0}', space=vmem, size = 0x1800, scoped, tag = 'input window, operand 0, single buffered']
    #allocation3 [shape = 's32[1]{0}', space=sflag, size = 0x4, scoped, tag = 'scoped memory for tpu_custom_call.1']
    #allocation4 [shape = 's32[1]{0}', space=sflag, size = 0x4, scoped, tag = 'scoped memory for tpu_custom_call.1']
    #allocation5 [shape = 'u8[8192]{0}', space=vmem, size = 0x2000, scoped, tag = 'input window, operand 1, single buffered']
    #allocation6 [shape = 's32[1]{0}', space=sflag, size = 0x4, scoped, tag = 'scoped memory for tpu_custom_call.1']
    #allocation7 [shape = 'u8[12288]{0}', space=vmem, size = 0x3000, scoped, tag = 'output window, operand 0, single buffered']
    %9 = vsyncpa [#allocation3], 0
    %10 = vsyncpa [#allocation6], 0
    %11 = vsyncpa [#allocation4], 0
    // Predicated region
    $region2: #{tpu_custom_call.1} parent=1 // pred_check
      _
    $region3: #{tpu_custom_call.1} parent=1 // pred_check_branch
      %13 = sbr.rel (0) target = $region5
    $region4: #{tpu_custom_call.1} parent=1 // pred_region
      %s15 = ssub.s32 192, 192
      %16 = vsyncadd [#allocation3], %s15
      %s17 = sshll.u32 [#allocation2], 4
      %s18 = int_to_ptr.vmem [resolvable:$true] %s17
      %23 = dma.hbm_to_vmem [thread:$0]  %s0, 192, %s18, [#allocation3], 64, 64, 4
    $region5: #{tpu_custom_call.1} parent=1 // pred_fallthru
      _
    // Predicated region
    $region6: #{tpu_custom_call.1} parent=1 // pred_check
      _
    $region7: #{tpu_custom_call.1} parent=1 // pred_check_branch
      %25 = sbr.rel (0) target = $region9
    $region8: #{tpu_custom_call.1} parent=1 // pred_region
      %s27 = ssub.s32 256, 256
      %28 = vsyncadd [#allocation6], %s27
      %s29 = sshll.u32 [#allocation5], 4
      %s30 = int_to_ptr.vmem [resolvable:$true] %s29
      %35 = dma.hbm_to_vmem [thread:$0]  %s1, 256, %s30, [#allocation6], 64, 64, 4
    $region9: #{tpu_custom_call.1} parent=1 // pred_fallthru
      _
    // Predicated region
    $region10: #{tpu_custom_call.1} parent=1 // pred_check
      _
    $region11: #{tpu_custom_call.1} parent=1 // pred_check_branch
      %37 = sbr.rel (0) target = $region13
    $region12: #{tpu_custom_call.1} parent=1 // pred_region
      _
    $region13: #{tpu_custom_call.1} parent=1 // pred_fallthru
      _
    // Predicated region
    $region14: #{tpu_custom_call.1} parent=1 // pred_check
      _
    $region15: #{tpu_custom_call.1} parent=1 // pred_check_branch
      %39 = sbr.rel (0) target = $region17
    $region16: #{tpu_custom_call.1} parent=1 // pred_region
      _
    $region17: #{tpu_custom_call.1} parent=1 // pred_fallthru
      _
    // Predicated region
    $region18: #{tpu_custom_call.1} parent=1 // pred_check
      _
    $region19: #{tpu_custom_call.1} parent=1 // pred_check_branch
      %41 = sbr.rel (0) target = $region21
    $region20: #{tpu_custom_call.1} parent=1 // pred_region
      %42 = dma.done [#allocation3], 192
    $region21: #{tpu_custom_call.1} parent=1 // pred_fallthru
      _
    // Predicated region
    $region22: #{tpu_custom_call.1} parent=1 // pred_check
      _
    $region23: #{tpu_custom_call.1} parent=1 // pred_check_branch
      %44 = sbr.rel (0) target = $region25
    $region24: #{tpu_custom_call.1} parent=1 // pred_region
      %45 = dma.done [#allocation6], 256
    $region25: #{tpu_custom_call.1} parent=1 // pred_fallthru
      _
    %v47 = vld [vmem:[#allocation2] sm:$0xf]
    %v48 = vld [vmem:[#allocation2 + $0x4] sm:$0xf]
    %v49 = vld [vmem:[#allocation2 + $0x8] sm:$0x3]
    %v50 = vld [vmem:[#allocation5] sm:$0xf]
    %v51 = vld [vmem:[#allocation5 + $0x4] sm:$0xf]
    %v52 = vld [vmem:[#allocation5 + $0x8] sm:$0xf]
    %v53 = vld [vmem:[#allocation5 + $0xc] sm:$0xf]
    %v57 = vunpack.c.l.b16 %v47
    %v58 = vunpack.c.l.b16 %v48
    %v59 = vunpack.c.l.b16 %v49
    %v60 = vpack.c.b16 %v58, %v57
    %v61 = vpack.c.b16 %v59, %v59
    %v66 = vunpack.c.l.b16 %v50
    %v67 = vunpack.c.l.b16 %v51
    %v68 = vunpack.c.l.b16 %v52
    %v69 = vunpack.c.l.b16 %v53
    %v70 = vpack.c.b16 %v67, %v66
    %v71 = vpack.c.b16 %v69, %v68
    %vm74 = vcmask 261120
    %v76 = vsel %vm74, %v60, 0
    %v79 = vsel %vm74, %v61, 0
    %81 = vmatprep.subr.bf16.mxu0 0
    %82 = vmatpush1.bf16.msra.mxu0 %v70
    %83 = vmatprep.subr.bf16.mxu0 0
    %84 = vmatpush1.bf16.msra.mxu0 %v71
    %85 = vmatprep.subr.bf16.mxu0 0
    %86 = vmatpush1.bf16.msra.mxu0 0
    %87 = vmatprep.subr.bf16.mxu0 0
    %88 = vmatpush1.bf16.msra.mxu0 0
    %89 = vmatprep.subr.bf16.mxu0 0
    %90 = vmatpush1.bf16.msra.mxu0 0
    %91 = vmatprep.subr.bf16.mxu0 0
    %92 = vmatpush1.bf16.msra.mxu0 0
    %93 = vmatprep.subr.bf16.mxu0 0
    %94 = vmatpush1.bf16.msra.mxu0 0
    %95 = vmatprep.subr.bf16.mxu0 0
    %96 = vmatpush1.bf16.msra.mxu0 0
    %97 = vmatprep.subr.bf16.mxu0 0
    %98 = vmatpush1.bf16.msra.mxu0 0
    %99 = vmatprep.subr.bf16.mxu0 0
    %100 = vmatpush1.bf16.msra.mxu0 0
    %101 = vmatprep.subr.bf16.mxu0 0
    %102 = vmatpush1.bf16.msra.mxu0 0
    %103 = vmatprep.subr.bf16.mxu0 0
    %104 = vmatpush1.bf16.msra.mxu0 0
    %105 = vmatprep.subr.bf16.mxu0 0
    %106 = vmatpush1.bf16.msra.mxu0 0
    %107 = vmatprep.subr.bf16.mxu0 0
    %108 = vmatpush1.bf16.msra.mxu0 0
    %109 = vmatprep.subr.bf16.mxu0 0
    %110 = vmatpush1.bf16.msra.mxu0 0
    %111 = vmatprep.subr.bf16.mxu0 0
    %112 = vmatpush1.bf16.msra.mxu0 0
    %113 = vmatprep.mubr.bf16.mxu0 0
    %114 = vmatmul.mubr.bf16.gmra.mrb[0].mxu0 %v76
    %v115 = vpop.f32.mrb[0].mxu0
    %v116 = vadd.f32 0.0, %v115
    %v117 = vpop.f32.mrb[0].mxu0
    %v118 = vpop.f32.mrb[0].mxu0
    %v119 = vadd.f32 0.0, %v118
    %v120 = vpop.f32.mrb[0].mxu0
    %121 = vmatprep.mubr.bf16.mxu0 0
    %122 = vmatmul.mubr.bf16.gmra.mrb[0].mxu0 %v79
    %v123 = vpop.f32.mrb[0].mxu0
    %v124 = vadd.f32 0.0, %v123
    %v125 = vpop.f32.mrb[0].mxu0
    %v126 = vpop.f32.mrb[0].mxu0
    %v127 = vpop.f32.mrb[0].mxu0
    %128 = vdwg.mxu0
    %v129 = vadd.f32 %v116, %v119
    %vm130 = vcmask 1043456
    %v131 = vsel %vm130, %v124, 0.0
    %v132 = vadd.f32 %v129, %v131
    %v133 = vrot.slane %v132, 4
    %v134 = vadd.f32 %v132, %v133
    %v135 = vrot.slane %v134, 2
    %v136 = vadd.f32 %v134, %v135
    %v137 = vrot.slane %v136, 1
    %v138 = vadd.f32 %v136, %v137
    %v139 = vrcp.pop 20.0
    %v140 = vmul.f32 %v138, %v139
    %v141 = vsub.f32 %v116, %v140
    %v142 = vsub.f32 %v119, %v140
    %v143 = vsub.f32 %v124, %v140
    %v144 = vmul.f32 %v141, %v141
    %v145 = vmul.f32 %v142, %v142
    %v146 = vmul.f32 %v143, %v143
    %v147 = vadd.f32 %v144, %v145
    %v148 = vsel %vm130, %v146, 0.0
    %v149 = vadd.f32 %v147, %v148
    %v150 = vrot.slane %v149, 4
    %v151 = vadd.f32 %v149, %v150
    %v152 = vrot.slane %v151, 2
    %v153 = vadd.f32 %v151, %v152
    %v154 = vrot.slane %v153, 1
    %v155 = vadd.f32 %v153, %v154
    %v156 = vmul.f32 %v155, %v139
    %v157 = vld [vmem:[%s2] sm:$0x1]
    %v158 = vadd.f32 %v156, 0.0001
    %v159 = vrsqrt.pop %v158
    %v160 = vmul.f32 %v157, %v159
    %v162 = vlaneseq
    %v163 = vshrl.u32 %v162, 7
    %v164 = vsub.s32 0, %v163
    %v165 = vrot.slane %v160, %v164
    %v167 = vmul.f32 %v141, %v165
    %v168 = vmul.f32 %v142, %v165
    %v169 = vmul.f32 %v143, %v165
    %v170 = vld [vmem:[%s3] sm:$0x1]
    %v172 = vlaneseq
    %v173 = vshrl.u32 %v172, 7
    %v174 = vsub.s32 0, %v173
    %v175 = vrot.slane %v170, %v174
    %v177 = vadd.f32 %v167, %v175
    %v178 = vadd.f32 %v168, %v175
    %v179 = vadd.f32 %v169, %v175
    %180 = vst [vmem:[#allocation7] sm:$0xff] %v177
    %181 = vst [vmem:[#allocation7 + $0x8] sm:$0xff] %v178
    %182 = vst [vmem:[#allocation7 + $0x10] sm:$0xf] %v179
    // Predicated region
    $region26: #{tpu_custom_call.1} parent=1 // pred_check
      _
    $region27: #{tpu_custom_call.1} parent=1 // pred_check_branch
      %184 = sbr.rel (0) target = $region29
    $region28: #{tpu_custom_call.1} parent=1 // pred_region
      %s186 = ssub.s32 384, 384
      %187 = vsyncadd [#allocation4], %s186
      %s188 = sshll.u32 [#allocation7], 4
      %s189 = int_to_ptr.vmem [resolvable:$true] %s188
      %194 = dma.vmem_to_hbm [thread:$0]  %s189, 384, %s4, [#allocation4], 128, 128, 8
    $region29: #{tpu_custom_call.1} parent=1 // pred_fallthru
      _
    // Predicated region
    $region30: #{tpu_custom_call.1} parent=1 // pred_check
      _
    $region31: #{tpu_custom_call.1} parent=1 // pred_check_branch
      %196 = sbr.rel (0) target = $region33
    $region32: #{tpu_custom_call.1} parent=1 // pred_region
      %197 = dma.done [#allocation4], 384
    $region33: #{tpu_custom_call.1} parent=1 // pred_fallthru
      _
    %198 = vsyncpa [#allocation3], 1
    %199 = vsyncpa [#allocation6], 1
    %200 = vsyncpa [#allocation4], 1

</llo_original>
